<compile_context>
chip_gen: v5e
topology: v5e:2x2
jax: 0.10.0
libtpu: 0.0.40
codegen_flags: <defaults>
</compile_context>

<pallas_src>
import jax
import jax.numpy as jnp
from jax.experimental import pallas as pl
from jax.experimental.pallas import tpu as pltpu


# ----------------------------- kernel ---------------------------------------


def masked_attn_pool_kernel(x_ref, mask_ref, q_ref, o_ref):
    x = x_ref[...]                                  # (TB, S, D), native dtype
    mask = mask_ref[...]                            # (TB, S)
    q = q_ref[...].astype(x.dtype)                  # (1, D)

    # attn_scores = x @ query.T  -> (TB, S).
    # VPU multiply in the native dtype, lane-direction reduce with f32
    # accumulation (kept off the MXU: a N=1 matvec only wastes MXU drain).
    scores = jnp.sum(x * q[None, :, :], axis=-1, dtype=jnp.float32)   # (TB, S)

    # masked_fill(mask.unsqueeze(-1) == 0, -inf)
    scores = jnp.where(mask == 0, -jnp.inf, scores)

    # softmax over the sequence axis (PyTorch dim=1)
    m = jnp.max(scores, axis=1, keepdims=True)      # (TB, 1)
    e = jnp.exp(scores - m)                         # (TB, S)
    denom = jnp.sum(e, axis=1, keepdims=True)       # (TB, 1)
    w = e / denom                                   # (TB, S) f32

    # (x * attn_weights).sum(dim=1) -> (TB, D); sublane-direction reduce,
    # multiply in native dtype, f32 accumulation.
    pooled = jnp.sum(x * w[:, :, None].astype(x.dtype), axis=1,
                     dtype=jnp.float32)             # (TB, D)

    o_ref[...] = pooled.astype(o_ref.dtype)


# ----------------------------- wrapper ---------------------------------------


def _round_up(v, m):
    return -(-v // m) * m


def _sublane_for_itemsize(itemsize):
    return {4: 8, 2: 16, 1: 32}.get(int(itemsize), 8)


def _vmem_budget():
    """Returns (vmem_limit_bytes, target_x_block_bytes) for this chip."""
    try:
        cap = int(pltpu.get_tpu_info().vmem_capacity_bytes)
    except Exception:
        cap = 64 * 1024 * 1024  # conservative: assume v7x-sized VMEM
    if cap >= 96 * 1024 * 1024:
        # v5e / v6e: 128 MiB physical VMEM, lowest relative HBM bandwidth ->
        # bigger blocks + raised scoped limit.
        return 80 * 1024 * 1024, 16 * 1024 * 1024
    # v7x: 64 MiB physical per TensorCore -> keep double-buffered x <= ~24 MiB.
    return 48 * 1024 * 1024, 12 * 1024 * 1024


def _choose_block_b(B, S, D, itemsize, target_block_bytes):
    sublane = _sublane_for_itemsize(itemsize)
    # Padded VMEM footprint of one batch row of the x block.
    padded_row_bytes = _round_up(S, sublane) * _round_up(D, 128) * itemsize
    block_b = max(1, target_block_bytes // padded_row_bytes)
    # Megacore (v7x): keep >= 2 grid blocks so both TensorCores get work.
    if B >= 16:
        block_b = min(block_b, -(-B // 2))
    if block_b >= B:
        return B
    # Tiles smaller than the full batch must keep the second-minor dim of the
    # (TB, S) / (TB, D) blocks sublane-friendly.
    block_b = max(8, (block_b // 8) * 8)
    return min(block_b, B)


def masked_cross_modal_attention_pool(
    x, mask, query, *, block_b=None, vmem_limit_bytes=None,
    target_block_bytes=None,
):
    """x: (B, S, D), mask: (B, S) {0,1}, query: (1, D)  ->  (B, D)."""
    B, S, D = x.shape
    out_dtype = x.dtype
    itemsize = jnp.dtype(x.dtype).itemsize

    default_limit, default_target = _vmem_budget()
    if vmem_limit_bytes is None:
        vmem_limit_bytes = default_limit
    if target_block_bytes is None:
        target_block_bytes = default_target

    if block_b is None:
        block_b = _choose_block_b(B, S, D, itemsize, target_block_bytes)
    else:
        block_b = int(max(1, min(block_b, B)))
        if block_b < B:
            block_b = min(max(8, (block_b // 8) * 8), B)

    nb = -(-B // block_b)  # ceil-div; last block may be partial (no x padding)

    # TODO(synk): for production D that is not a multiple of 128, fold batch
    # rows into the lane axis of the output block to avoid masked vst stores
    # and the up-to-128/D lane padding of the x tile.
    out = pl.pallas_call(
        masked_attn_pool_kernel,
        out_shape=jax.ShapeDtypeStruct((B, D), out_dtype),
        grid=(nb,),
        in_specs=[
            # x: last two block dims equal the full (S, D) -> any block_b legal.
            pl.BlockSpec((block_b, S, D), lambda b: (b, 0, 0)),
            pl.BlockSpec((block_b, S), lambda b: (b, 0)),
            pl.BlockSpec((1, D), lambda b: (0, 0)),   # query: resident block
        ],
        out_specs=pl.BlockSpec((block_b, D), lambda b: (b, 0)),
        compiler_params=pltpu.CompilerParams(
            dimension_semantics=("parallel",),
            vmem_limit_bytes=int(vmem_limit_bytes),
        ),
    )(x, mask, query)

    return out


# ----------------------------- reference / tests -----------------------------


def _reference(x, mask, query):
    scores = jnp.einsum("bsd,od->bs", x, query)               # (B, S)
    scores = jnp.where(mask == 0, -jnp.inf, scores)
    w = jax.nn.softmax(scores, axis=1)
    return jnp.sum(x * w[:, :, None], axis=1)


def _run_case(key, B, S, D, block_b=None):
    kx, kq, km = jax.random.split(key, 3)
    x = jax.random.normal(kx, (B, S, D), dtype=jnp.float32)
    query = jax.random.normal(kq, (1, D), dtype=jnp.float32)
    mask = jax.random.bernoulli(km, p=0.7, shape=(B, S)).astype(jnp.float32)
    mask = mask.at[:, 0].set(1.0)   # keep at least one valid position per row

    out = masked_cross_modal_attention_pool(x, mask, query, block_b=block_b)
    out = jax.block_until_ready(out)

    ref = _reference(x, mask, query)
    assert out.shape == (B, D)
    assert jnp.allclose(out, ref, atol=1e-5, rtol=1e-5), "mismatch vs reference"


if __name__ == "__main__":
    key = jax.random.PRNGKey(0)
    k1, k2, k3 = jax.random.split(key, 3)

    # Module-consistent small shapes: batch=2, seq=8, hidden=32.
    _run_case(k1, B=2, S=8, D=32)
    # Multi-block path (grid > 1), lane-dense D.
    _run_case(k2, B=24, S=16, D=128, block_b=8)
    # Partial tail block (B not a multiple of the batch tile, NO x padding).
    _run_case(k3, B=10, S=8, D=32, block_b=8)

    print("KERNEL_OK")
</pallas_src>

<mosaic_0001>
module attributes {stable_mosaic.version = 11 : i64} {
  func.func @masked_attn_pool_kernel(%arg0: i32, %arg1: memref<2x8x32xf32, #tpu.memory_space<vmem>>, %arg2: memref<2x8xf32, #tpu.memory_space<vmem>>, %arg3: memref<1x32xf32, #tpu.memory_space<vmem>>, %arg4: memref<2x32xf32, #tpu.memory_space<vmem>>) attributes {dimension_semantics = [#tpu.dimension_semantics<parallel>], iteration_bounds = array<i64: 1>, scalar_prefetch = 0 : i64, scratch_operands = 0 : i64, tpu.core_type = #tpu.core_type<tc>, window_params = [{transform_indices = @transform_0, window_bounds = array<i64: 2, 8, 32>}, {transform_indices = @transform_1, window_bounds = array<i64: 2, 8>}, {pipeline_mode = #tpu.pipeline_mode<synchronous>, transform_indices = @transform_2, window_bounds = array<i64: 1, 32>}, {transform_indices = @transform_3, window_bounds = array<i64: 2, 32>}]} {
    %c0 = arith.constant 0 : index
    %c0_0 = arith.constant 0 : index
    %c0_1 = arith.constant 0 : index
    %0 = vector.load %arg1[%c0, %c0_0, %c0_1] : memref<2x8x32xf32, #tpu.memory_space<vmem>>, vector<2x8x32xf32>
    %c0_2 = arith.constant 0 : index
    %c0_3 = arith.constant 0 : index
    %1 = vector.load %arg2[%c0_2, %c0_3] : memref<2x8xf32, #tpu.memory_space<vmem>>, vector<2x8xf32>
    %c0_4 = arith.constant 0 : index
    %c0_5 = arith.constant 0 : index
    %2 = vector.load %arg3[%c0_4, %c0_5] : memref<1x32xf32, #tpu.memory_space<vmem>>, vector<1x32xf32>
    %3 = vector.shape_cast %2 : vector<1x32xf32> to vector<1x1x32xf32>
    %4 = vector.broadcast %3 : vector<1x1x32xf32> to vector<2x8x32xf32>
    %5 = arith.mulf %0, %4 : vector<2x8x32xf32>
    %cst = arith.constant dense<0.000000e+00> : vector<2x8xf32>
    %6 = vector.multi_reduction <add>, %5, %cst [2] : vector<2x8x32xf32> to vector<2x8xf32>
    %cst_6 = arith.constant 0.000000e+00 : f32
    %7 = vector.broadcast %cst_6 : f32 to vector<2x8xf32>
    %8 = arith.cmpf oeq, %1, %7 : vector<2x8xf32>
    %cst_7 = arith.constant 0xFF800000 : f32
    %9 = vector.broadcast %cst_7 : f32 to vector<2x8xf32>
    %10 = arith.select %8, %9, %6 : vector<2x8xi1>, vector<2x8xf32>
    %cst_8 = arith.constant dense<0xFF800000> : vector<2xf32>
    %11 = vector.multi_reduction <maximumf>, %10, %cst_8 [1] : vector<2x8xf32> to vector<2xf32>
    %12 = vector.shape_cast %11 : vector<2xf32> to vector<2x1xf32>
    %13 = vector.broadcast %12 : vector<2x1xf32> to vector<2x8xf32>
    %14 = arith.subf %10, %13 : vector<2x8xf32>
    %15 = math.exp %14 : vector<2x8xf32>
    %cst_9 = arith.constant dense<0.000000e+00> : vector<2xf32>
    %16 = vector.multi_reduction <add>, %15, %cst_9 [1] : vector<2x8xf32> to vector<2xf32>
    %17 = vector.shape_cast %16 : vector<2xf32> to vector<2x1xf32>
    %18 = vector.broadcast %17 : vector<2x1xf32> to vector<2x8xf32>
    %19 = arith.divf %15, %18 : vector<2x8xf32>
    %20 = vector.shape_cast %19 : vector<2x8xf32> to vector<2x8x1xf32>
    %21 = vector.broadcast %20 : vector<2x8x1xf32> to vector<2x8x32xf32>
    %22 = arith.mulf %0, %21 : vector<2x8x32xf32>
    %cst_10 = arith.constant dense<0.000000e+00> : vector<2x32xf32>
    %23 = vector.multi_reduction <add>, %22, %cst_10 [1] : vector<2x8x32xf32> to vector<2x32xf32>
    %c0_11 = arith.constant 0 : index
    %c0_12 = arith.constant 0 : index
    %24 = vector.load %arg4[%c0_11, %c0_12] : memref<2x32xf32, #tpu.memory_space<vmem>>, vector<2x32xf32>
    tpu.vector_store %arg4[%c0_11, %c0_12], %23 {strides = array<i32>} : memref<2x32xf32, #tpu.memory_space<vmem>>, vector<2x32xf32>,
    return
  }
  func.func @transform_0(%arg0: i32) -> (i32, i32, i32) {
    %c0_i32 = arith.constant 0 : i32
    %c0_i32_0 = arith.constant 0 : i32
    %c0_i32_1 = arith.constant 0 : i32
    return %arg0, %c0_i32, %c0_i32_0 : i32, i32, i32
  }
  func.func @transform_1(%arg0: i32) -> (i32, i32) {
    %c0_i32 = arith.constant 0 : i32
    %c0_i32_0 = arith.constant 0 : i32
    return %arg0, %c0_i32 : i32, i32
  }
  func.func @transform_2(%arg0: i32) -> (i32, i32) {
    %c0_i32 = arith.constant 0 : i32
    %c0_i32_0 = arith.constant 0 : i32
    %c0_i32_1 = arith.constant 0 : i32
    return %c0_i32, %c0_i32_0 : i32, i32
  }
  func.func @transform_3(%arg0: i32) -> (i32, i32) {
    %c0_i32 = arith.constant 0 : i32
    %c0_i32_0 = arith.constant 0 : i32
    return %arg0, %c0_i32 : i32, i32
  }
}

</mosaic_0001>

<llo_original>
// kernel: tpu_custom_call.1
$region0: #{tpu_custom_call.1}
  #allocation0 [shape = 'u32[]', space=smem, size = 0x4, offset = 0x4, fixed_abs, tag = 'smem constant byte address 0x4 - core index']
  #allocation1 [shape = 'u32[72,128]{1,0:T(1,128)}', space=vmem, size = 0x9000, scoped, tag = 'internal scratch']
  %s0 = inlined_call_operand.hbm [shape: f32[2,8,32], index: 0, kind: input, shape index: {}]
  %s1 = inlined_call_operand.hbm [shape: f32[2,8], index: 1, kind: input, shape index: {}]
  %s2 = inlined_call_operand.vmem [shape: f32[1,32], index: 2, kind: input, shape index: {}]
  %s3 = inlined_call_operand.hbm [shape: f32[2,32], index: 3, kind: output, shape index: {}]
  %s4 = sld [smem:[#allocation0]]
  $region30: #{tpu_custom_call.1} parent=0
    _
  %s6 = ssub.s32 1, %s4
  %s7 = scalar_select 0, %s6, %s4
  $region1: #{tpu_custom_call.1} parent=0
    #allocation2 [shape = 'u8[8192]{0}', space=vmem, size = 0x2000, scoped, tag = 'input window, operand 0, single buffered']
    #allocation3 [shape = 's32[1]{0}', space=sflag, size = 0x4, scoped, tag = 'scoped memory for tpu_custom_call.1']
    #allocation4 [shape = 's32[1]{0}', space=sflag, size = 0x4, scoped, tag = 'scoped memory for tpu_custom_call.1']
    #allocation5 [shape = 'u8[1024]{0}', space=vmem, size = 0x400, scoped, tag = 'input window, operand 1, single buffered']
    #allocation6 [shape = 's32[1]{0}', space=sflag, size = 0x4, scoped, tag = 'scoped memory for tpu_custom_call.1']
    #allocation7 [shape = 'u8[1024]{0}', space=vmem, size = 0x400, scoped, tag = 'output window, operand 0, single buffered']
    %8 = vsyncpa [#allocation3], 0
    %9 = vsyncpa [#allocation6], 0
    %10 = vsyncpa [#allocation4], 0
    // Predicated region
    $region2: #{tpu_custom_call.1} parent=1 // pred_check
      _
    $region3: #{tpu_custom_call.1} parent=1 // pred_check_branch
      %12 = sbr.rel (0) target = $region5
    $region4: #{tpu_custom_call.1} parent=1 // pred_region
      %14 = vsyncadd [#allocation3], 0
      %s15 = sshll.u32 %s0, 4
      %s16 = int_to_ptr.hbm [resolvable:$true] %s15
      %s17 = sshll.u32 [#allocation2], 4
      %s18 = int_to_ptr.vmem [resolvable:$true] %s17
      %23 = dma.hbm_to_vmem [thread:$0]  %s16, 256, %s18, [#allocation3], 128, 128, 8
    $region5: #{tpu_custom_call.1} parent=1 // pred_fallthru
      _
    // Predicated region
    $region6: #{tpu_custom_call.1} parent=1 // pred_check
      _
    $region7: #{tpu_custom_call.1} parent=1 // pred_check_branch
      %25 = sbr.rel (0) target = $region9
    $region8: #{tpu_custom_call.1} parent=1 // pred_region
      %27 = vsyncadd [#allocation6], 0
      %s29 = sshll.u32 %s1, 4
      %s30 = int_to_ptr.hbm [resolvable:$true] %s29
      %s31 = sshll.u32 [#allocation5], 4
      %s32 = int_to_ptr.vmem [resolvable:$true] %s31
      %34 = dma.hbm_to_vmem [thread:$0]  %s30, 32, %s32, [#allocation6]
    $region9: #{tpu_custom_call.1} parent=1 // pred_fallthru
      _
    // Predicated region
    $region10: #{tpu_custom_call.1} parent=1 // pred_check
      _
    $region11: #{tpu_custom_call.1} parent=1 // pred_check_branch
      %36 = sbr.rel (0) target = $region13
    $region12: #{tpu_custom_call.1} parent=1 // pred_region
      _
    $region13: #{tpu_custom_call.1} parent=1 // pred_fallthru
      _
    // Predicated region
    $region14: #{tpu_custom_call.1} parent=1 // pred_check
      _
    $region15: #{tpu_custom_call.1} parent=1 // pred_check_branch
      %38 = sbr.rel (0) target = $region17
    $region16: #{tpu_custom_call.1} parent=1 // pred_region
      %40 = dma.done [#allocation3], 256
    $region17: #{tpu_custom_call.1} parent=1 // pred_fallthru
      _
    // Predicated region
    $region18: #{tpu_custom_call.1} parent=1 // pred_check
      _
    $region19: #{tpu_custom_call.1} parent=1 // pred_check_branch
      %42 = sbr.rel (0) target = $region21
    $region20: #{tpu_custom_call.1} parent=1 // pred_region
      %44 = dma.done [#allocation6], 32
    $region21: #{tpu_custom_call.1} parent=1 // pred_fallthru
      _
    %v45 = vld [vmem:[#allocation2] sm:$0xff]
    %v46 = vld [vmem:[#allocation2 + $0x8] sm:$0xff]
    %v47 = vld [vmem:[#allocation5] sm:$0x3]
    %v48 = vld [vmem:[%s2] sm:$0x1]
    %v50 = vperm.slane %v48, 0
    %v52 = vmul.f32 %v45, %v50
    %v53 = vmul.f32 %v46, %v50
    %vm54 = vcmask 261120
    %v55 = vsel %vm54, %v52, 0.0
    %56 = vadd.xlane.f32.xlu0 %v55
    %v57 = vpop.xlane.xlu0 %56
    %v58 = vsel %vm54, %v53, 0.0
    %59 = vadd.xlane.f32.xlu0 %v58
    %v60 = vpop.xlane.xlu0 %59
    %vm61 = vcmp.eq.f32.partialorder %v47, 0.0
    %v64 = vlaneseq
    %v65 = vand.u32 %v64, 127
    %v66 = vperm.slane %v57, %v65
    %v67 = vperm.slane %v60, %v65
    %vm68 = vcmask 1041409
    %v69 = vsel %vm68, %v67, %v66
    %v71 = vsel %vm61, -inf, %v69
    %vm72 = vcmask 58368
    %v73 = vsel %vm72, %v71, -inf
    %74 = vmax.xlane.f32.xlu0 %v73
    %v75 = vpop.xlane.xlu0 %74
    %v76 = vsub.f32 %v71, %v75
    %v77 = vmul.f32 %v76, 1.442695
    %v78 = vpow.pop %v77
    %v79 = vsel %vm72, %v78, 0.0
    %80 = vadd.xlane.f32.xlu0 %v79
    %v81 = vpop.xlane.xlu0 %80
    %v82 = vrcp.pop %v81
    %v83 = vmul.f32 %v81, %v82
    %v84 = vsub.f32 1.0, %v83
    %v85 = vmul.f32 %v82, %v84
    %v86 = vadd.f32 %v82, %v85
    %vm87 = vweird.f32 %v81
    %vm88 = vweird.f32 %v82
    %vm89 = vmor %vm87, %vm88
    %v90 = vsel %vm89, %v82, %v86
    %v91 = vand.u32 2147483647, %v81
    %vm92 = vcmp.eq.f32.partialorder %v91, 8.507059e+37
    %v93 = vand.u32 %v81, 2147483648
    %v94 = vor.u32 1.1754944e-38, %v93
    %v95 = vsel %vm92, %v94, %v90
    %v96 = vmul.f32 %v78, %v95
    %v97 = vperm.slane %v96, 0
    %v98 = vlaneseq
    %v99 = vshrl.u32 %v98, 7
    %101 = vset.pattern.permute.xlu0 %v99
    %102 = vperm.xlu0 %101, %v97
    %v103 = vpop.permute.xlu0 %102
    %v104 = vperm.slane %v96, 1
    %v105 = vlaneseq
    %v106 = vshrl.u32 %v105, 7
    %108 = vset.pattern.permute.xlu0 %v106
    %109 = vperm.xlu0 %108, %v104
    %v110 = vpop.permute.xlu0 %109
    %v111 = vmul.f32 %v45, %v103
    %v112 = vmul.f32 %v46, %v110
    %v113 = vsel %vm54, %v111, 0.0
    %v114 = vrot.slane %v113, 4
    %v115 = vadd.f32 %v113, %v114
    %v116 = vrot.slane %v115, 2
    %v117 = vadd.f32 %v115, %v116
    %v118 = vrot.slane %v117, 1
    %v119 = vadd.f32 %v117, %v118
    %v120 = vsel %vm54, %v112, 0.0
    %v121 = vrot.slane %v120, 4
    %v122 = vadd.f32 %v120, %v121
    %v123 = vrot.slane %v122, 2
    %v124 = vadd.f32 %v122, %v123
    %v125 = vrot.slane %v124, 1
    %v126 = vadd.f32 %v124, %v125
    %v129 = vsel %vm68, %v126, %v119
    %vm131 = vcmask 254976
    %132 = vst.msk [vmem:[#allocation7] sm:$0x3] %vm131, %v129
    // Predicated region
    $region22: #{tpu_custom_call.1} parent=1 // pred_check
      _
    $region23: #{tpu_custom_call.1} parent=1 // pred_check_branch
      %134 = sbr.rel (0) target = $region25
    $region24: #{tpu_custom_call.1} parent=1 // pred_region
      %136 = vsyncadd [#allocation4], 0
      %s138 = sshll.u32 [#allocation7], 4
      %s139 = int_to_ptr.vmem [resolvable:$true] %s138
      %s140 = sshll.u32 %s3, 4
      %s141 = int_to_ptr.hbm [resolvable:$true] %s140
      %143 = dma.vmem_to_hbm [thread:$0]  %s139, 32, %s141, [#allocation4]
    $region25: #{tpu_custom_call.1} parent=1 // pred_fallthru
      _
    // Predicated region
    $region26: #{tpu_custom_call.1} parent=1 // pred_check
      _
    $region27: #{tpu_custom_call.1} parent=1 // pred_check_branch
      %145 = sbr.rel (0) target = $region29
    $region28: #{tpu_custom_call.1} parent=1 // pred_region
      %147 = dma.done [#allocation4], 32
    $region29: #{tpu_custom_call.1} parent=1 // pred_fallthru
      _
    %148 = vsyncpa [#allocation3], 1
    %149 = vsyncpa [#allocation6], 1
    %150 = vsyncpa [#allocation4], 1

</llo_original>
